<compile_context>
chip_gen: v7x
topology: tpu7x:2x2x1
jax: 0.10.0
libtpu: 0.0.40
codegen_flags: <defaults>
</compile_context>

<pallas_src>
import functools

import jax
import jax.numpy as jnp
from jax.experimental import pallas as pl
from jax.experimental.pallas import tpu as pltpu


def _round_up(x, m):
    return ((x + m - 1) // m) * m


def _gcn_layer_kernel(a_ref, x_ref, w_ref, b_ref, o_ref, acc_ref, *, apply_relu):
    """One GraphConv layer row-tile: acc += A_blk @ X_blk; finalize does @W + b (+ReLU)."""
    k = pl.program_id(1)

    @pl.when(k == 0)
    def _():
        acc_ref[...] = jnp.zeros_like(acc_ref)

    # Neighbour aggregation on the MXU (bf16 operands, f32 accumulation).
    acc_ref[...] += jnp.dot(
        a_ref[...], x_ref[...], preferred_element_type=jnp.float32
    )

    @pl.when(k == pl.num_programs(1) - 1)
    def _():
        agg = acc_ref[...].astype(jnp.bfloat16)
        h = jnp.dot(agg, w_ref[...], preferred_element_type=jnp.float32) + b_ref[...]
        if apply_relu:
            h = jnp.maximum(h, 0.0)
        o_ref[...] = h.astype(o_ref.dtype)


def gcn_layer(adj, x, w, b, *, apply_relu, out_dtype, tile=256):
    """out = maybe_relu((adj @ x) @ w + b), tiled over node rows / A columns."""
    n_pad = adj.shape[0]
    fin = x.shape[1]
    fout = w.shape[1]
    tm = min(tile, n_pad)
    tk = min(tile, n_pad)
    grid = (n_pad // tm, n_pad // tk)

    # Advisory cost estimate (aggregation + one W matmul per row tile).
    flops = 2 * n_pad * n_pad * fin + 2 * n_pad * fin * fout
    bytes_accessed = (
        adj.size * 2
        + grid[0] * x.size * 2
        + grid[0] * (w.size * 2 + b.size * 4)
        + n_pad * fout * jnp.dtype(out_dtype).itemsize
    )

    kernel = functools.partial(_gcn_layer_kernel, apply_relu=apply_relu)
    return pl.pallas_call(
        kernel,
        out_shape=jax.ShapeDtypeStruct((n_pad, fout), out_dtype),
        grid_spec=pltpu.PrefetchScalarGridSpec(
            num_scalar_prefetch=0,
            grid=grid,
            in_specs=[
                pl.BlockSpec((tm, tk), lambda i, k: (i, k)),      # A_hat block
                pl.BlockSpec((tk, fin), lambda i, k: (k, 0)),     # X rows for this k
                pl.BlockSpec((fin, fout), lambda i, k: (0, 0)),   # W (resident)
                pl.BlockSpec((1, fout), lambda i, k: (0, 0)),     # bias (resident)
            ],
            out_specs=pl.BlockSpec((tm, fout), lambda i, k: (i, 0)),
            scratch_shapes=[pltpu.VMEM((tm, fin), jnp.float32)],
        ),
        compiler_params=pltpu.CompilerParams(
            dimension_semantics=("parallel", "arbitrary"),
            vmem_limit_bytes=48 * 1024 * 1024,
        ),
        cost_estimate=pl.CostEstimate(
            flops=flops, transcendentals=0, bytes_accessed=bytes_accessed
        ),
    )(adj, x, w, b)


def gcn_forward(adj_hat, x, w1, b1, w2, b2, *, tile=256):
    """Two GraphConv layers with ReLU in between; matches GCN.forward."""
    n = x.shape[0]
    in_feats = x.shape[1]
    hidden = w1.shape[1]
    out_feats = w2.shape[1]

    n_pad = _round_up(n, tile)
    fin_p = _round_up(in_feats, 128)
    hid_p = _round_up(hidden, 128)
    out_p = _round_up(out_feats, 128)

    # Zero-pad to lane/tile friendly shapes; bf16 MXU operands, f32 biases.
    adj_p = jnp.zeros((n_pad, n_pad), jnp.float32).at[:n, :n].set(adj_hat)
    adj_p = adj_p.astype(jnp.bfloat16)
    x_p = jnp.zeros((n_pad, fin_p), jnp.float32).at[:n, :in_feats].set(x)
    x_p = x_p.astype(jnp.bfloat16)
    w1_p = jnp.zeros((fin_p, hid_p), jnp.float32).at[:in_feats, :hidden].set(w1)
    w1_p = w1_p.astype(jnp.bfloat16)
    b1_p = jnp.zeros((1, hid_p), jnp.float32).at[0, :hidden].set(b1)
    w2_p = jnp.zeros((hid_p, out_p), jnp.float32).at[:hidden, :out_feats].set(w2)
    w2_p = w2_p.astype(jnp.bfloat16)
    b2_p = jnp.zeros((1, out_p), jnp.float32).at[0, :out_feats].set(b2)

    h1 = gcn_layer(adj_p, x_p, w1_p, b1_p,
                   apply_relu=True, out_dtype=jnp.bfloat16, tile=tile)
    y = gcn_layer(adj_p, h1, w2_p, b2_p,
                  apply_relu=False, out_dtype=jnp.float32, tile=tile)
    return y[:n, :out_feats]


def normalize_adjacency(adj):
    # DGL norm='both': D^{-1/2} A D^{-1/2}, zero-degree clamped to 1.
    deg = jnp.maximum(adj.sum(axis=1), 1.0)
    norm = deg ** -0.5
    return norm[:, None] * adj * norm[None, :]


def gcn_reference(adj_hat, x, w1, b1, w2, b2):
    h = adj_hat @ (x @ w1) + b1
    h = jnp.maximum(h, 0.0)
    return adj_hat @ (h @ w2) + b2


def xavier_uniform(key, shape):
    fan_in, fan_out = shape
    limit = jnp.sqrt(6.0 / (fan_in + fan_out))
    return jax.random.uniform(key, shape, jnp.float32, -limit, limit)


# TODO(synk): block-sparse aggregation (scalar-prefetch of nonzero A-block ids)
# would skip all-zero adjacency tiles; not applied at this toy size.

if __name__ == "__main__":
    key = jax.random.PRNGKey(0)
    k_adj, k_x, k_w1, k_w2 = jax.random.split(key, 4)

    # Small graph: N nodes, in_feats -> hidden -> out_feats
    N, in_feats, hidden, out_feats = 16, 8, 32, 4

    # Deterministic random undirected graph (no self-loops), dense adjacency.
    upper = jax.random.bernoulli(k_adj, 0.3, (N, N)).astype(jnp.float32)
    upper = jnp.triu(upper, k=1)
    adj = upper + upper.T
    adj_hat = normalize_adjacency(adj)

    # Node features and deterministic parameter init (xavier weights, zero bias
    # as in dgl.nn.GraphConv.reset_parameters).
    x = jax.random.normal(k_x, (N, in_feats), jnp.float32)
    w1 = xavier_uniform(k_w1, (in_feats, hidden))
    b1 = jnp.zeros((hidden,), jnp.float32)
    w2 = xavier_uniform(k_w2, (hidden, out_feats))
    b2 = jnp.zeros((out_feats,), jnp.float32)

    out = gcn_forward(adj_hat, x, w1, b1, w2, b2)
    out = jax.block_until_ready(out)

    ref = gcn_reference(adj_hat, x, w1, b1, w2, b2)
    assert out.shape == (N, out_feats)
    # bf16 MXU operands => looser tolerance than the pure-f32 reference.
    assert jnp.allclose(out, ref, atol=5e-2, rtol=5e-2), "mismatch vs reference"

    print("KERNEL_OK")
</pallas_src>

<mosaic_0001>
module attributes {stable_mosaic.version = 11 : i64} {
  func.func @_gcn_layer_kernel(%arg0: i32, %arg1: i32, %arg2: memref<256x256xbf16, #tpu.memory_space<vmem>>, %arg3: memref<256x128xbf16, #tpu.memory_space<vmem>>, %arg4: memref<128x128xbf16, #tpu.memory_space<vmem>>, %arg5: memref<1x128xf32, #tpu.memory_space<vmem>>, %arg6: memref<256x128xbf16, #tpu.memory_space<vmem>>, %arg7: memref<256x128xf32, #tpu.memory_space<vmem>>) attributes {dimension_semantics = [#tpu.dimension_semantics<parallel>, #tpu.dimension_semantics<arbitrary>], iteration_bounds = array<i64: 1, 1>, scalar_prefetch = 0 : i64, scratch_operands = 1 : i64, tpu.core_type = #tpu.core_type<tc>, window_params = [{transform_indices = @transform_0, window_bounds = array<i64: 256, 256>}, {transform_indices = @transform_1, window_bounds = array<i64: 256, 128>}, {pipeline_mode = #tpu.pipeline_mode<synchronous>, transform_indices = @transform_2, window_bounds = array<i64: 128, 128>}, {pipeline_mode = #tpu.pipeline_mode<synchronous>, transform_indices = @transform_3, window_bounds = array<i64: 1, 128>}, {transform_indices = @transform_4, window_bounds = array<i64: 256, 128>}]} {
    %c0_i32 = arith.constant 0 : i32
    %0 = arith.cmpi eq, %arg1, %c0_i32 : i32
    %1 = arith.extui %0 : i1 to i32
    %c0_i32_0 = arith.constant 0 : i32
    %2 = arith.cmpi ne, %1, %c0_i32_0 : i32
    scf.if %2 {
      %cst_10 = arith.constant 0.000000e+00 : f32
      %12 = vector.broadcast %cst_10 : f32 to vector<256x128xf32>
      %c0_11 = arith.constant 0 : index
      %c0_12 = arith.constant 0 : index
      %13 = vector.load %arg7[%c0_11, %c0_12] : memref<256x128xf32, #tpu.memory_space<vmem>>, vector<256x128xf32>
      tpu.vector_store %arg7[%c0_11, %c0_12], %12 {strides = array<i32>} : memref<256x128xf32, #tpu.memory_space<vmem>>, vector<256x128xf32>,
    } else {
    }
    %c0 = arith.constant 0 : index
    %c0_1 = arith.constant 0 : index
    %3 = vector.load %arg7[%c0, %c0_1] : memref<256x128xf32, #tpu.memory_space<vmem>>, vector<256x128xf32>
    %c0_2 = arith.constant 0 : index
    %c0_3 = arith.constant 0 : index
    %4 = vector.load %arg2[%c0_2, %c0_3] : memref<256x256xbf16, #tpu.memory_space<vmem>>, vector<256x256xbf16>
    %c0_4 = arith.constant 0 : index
    %c0_5 = arith.constant 0 : index
    %5 = vector.load %arg3[%c0_4, %c0_5] : memref<256x128xbf16, #tpu.memory_space<vmem>>, vector<256x128xbf16>
    %cst = arith.constant dense<0.000000e+00> : vector<256x128xf32>
    %6 = tpu.matmul %4, %5, %cst {dimension_numbers = #tpu.dot_dimension_numbers<[1], [0], [0], [1], [0, 0, 1, 1], [], []>} : vector<256x256xbf16>, vector<256x128xbf16>, vector<256x128xf32> -> vector<256x128xf32>
    %7 = arith.addf %3, %6 : vector<256x128xf32>
    %c0_6 = arith.constant 0 : index
    %c0_7 = arith.constant 0 : index
    %8 = vector.load %arg7[%c0_6, %c0_7] : memref<256x128xf32, #tpu.memory_space<vmem>>, vector<256x128xf32>
    tpu.vector_store %arg7[%c0_6, %c0_7], %7 {strides = array<i32>} : memref<256x128xf32, #tpu.memory_space<vmem>>, vector<256x128xf32>,
    %c0_i32_8 = arith.constant 0 : i32
    %9 = arith.cmpi eq, %arg1, %c0_i32_8 : i32
    %10 = arith.extui %9 : i1 to i32
    %c0_i32_9 = arith.constant 0 : i32
    %11 = arith.cmpi ne, %10, %c0_i32_9 : i32
    scf.if %11 {
      %c0_10 = arith.constant 0 : index
      %c0_11 = arith.constant 0 : index
      %12 = vector.load %arg7[%c0_10, %c0_11] : memref<256x128xf32, #tpu.memory_space<vmem>>, vector<256x128xf32>
      %13 = arith.truncf %12 : vector<256x128xf32> to vector<256x128xbf16>
      %c0_12 = arith.constant 0 : index
      %c0_13 = arith.constant 0 : index
      %14 = vector.load %arg4[%c0_12, %c0_13] : memref<128x128xbf16, #tpu.memory_space<vmem>>, vector<128x128xbf16>
      %cst_14 = arith.constant dense<0.000000e+00> : vector<256x128xf32>
      %15 = tpu.matmul %13, %14, %cst_14 {dimension_numbers = #tpu.dot_dimension_numbers<[1], [0], [0], [1], [0, 0, 1, 1], [], []>} : vector<256x128xbf16>, vector<128x128xbf16>, vector<256x128xf32> -> vector<256x128xf32>
      %c0_15 = arith.constant 0 : index
      %c0_16 = arith.constant 0 : index
      %16 = vector.load %arg5[%c0_15, %c0_16] : memref<1x128xf32, #tpu.memory_space<vmem>>, vector<1x128xf32>
      %17 = vector.broadcast %16 : vector<1x128xf32> to vector<256x128xf32>
      %18 = arith.addf %15, %17 : vector<256x128xf32>
      %cst_17 = arith.constant 0.000000e+00 : f32
      %19 = vector.broadcast %cst_17 : f32 to vector<256x128xf32>
      %20 = arith.maximumf %18, %19 : vector<256x128xf32>
      %21 = arith.truncf %20 : vector<256x128xf32> to vector<256x128xbf16>
      %c0_18 = arith.constant 0 : index
      %c0_19 = arith.constant 0 : index
      %22 = vector.load %arg6[%c0_18, %c0_19] : memref<256x128xbf16, #tpu.memory_space<vmem>>, vector<256x128xbf16>
      tpu.vector_store %arg6[%c0_18, %c0_19], %21 {strides = array<i32>} : memref<256x128xbf16, #tpu.memory_space<vmem>>, vector<256x128xbf16>,
    } else {
    }
    return
  }
  func.func @transform_0(%arg0: i32, %arg1: i32) -> (i32, i32) {
    %c0_i32 = arith.constant 0 : i32
    return %arg0, %arg1 : i32, i32
  }
  func.func @transform_1(%arg0: i32, %arg1: i32) -> (i32, i32) {
    %c0_i32 = arith.constant 0 : i32
    %c0_i32_0 = arith.constant 0 : i32
    return %arg1, %c0_i32 : i32, i32
  }
  func.func @transform_2(%arg0: i32, %arg1: i32) -> (i32, i32) {
    %c0_i32 = arith.constant 0 : i32
    %c0_i32_0 = arith.constant 0 : i32
    %c0_i32_1 = arith.constant 0 : i32
    return %c0_i32, %c0_i32_0 : i32, i32
  }
  func.func @transform_3(%arg0: i32, %arg1: i32) -> (i32, i32) {
    %c0_i32 = arith.constant 0 : i32
    %c0_i32_0 = arith.constant 0 : i32
    %c0_i32_1 = arith.constant 0 : i32
    return %c0_i32, %c0_i32_0 : i32, i32
  }
  func.func @transform_4(%arg0: i32, %arg1: i32) -> (i32, i32) {
    %c0_i32 = arith.constant 0 : i32
    %c0_i32_0 = arith.constant 0 : i32
    return %arg0, %c0_i32 : i32, i32
  }
}

</mosaic_0001>

<llo_original>
// kernel: tpu_custom_call.1
$region0: #{tpu_custom_call.1}
  #allocation0 [shape = 'u32[]', space=smem, size = 0x4, offset = 0x4, fixed_abs, tag = 'smem constant byte address 0x4 - core index']
  #allocation1 [shape = 'u32[144,128]{1,0:T(1,128)}', space=vmem, size = 0x12000, scoped, tag = 'internal scratch']
  #allocation2 [shape = 'f32[256,128]{1,0:T(8,128)}', space=vmem, size = 0x20000, scoped, tag = 'scratch operand']
  %s0 = inlined_call_operand.hbm [shape: bf16[256,256], index: 0, kind: input, shape index: {}]
  %s1 = inlined_call_operand.hbm [shape: bf16[256,128], index: 1, kind: input, shape index: {}]
  %s2 = inlined_call_operand.hbm [shape: bf16[128,128], index: 2, kind: input, shape index: {}]
  %s3 = inlined_call_operand.vmem [shape: f32[1,128], index: 3, kind: input, shape index: {}]
  %s4 = inlined_call_operand.hbm [shape: bf16[256,128], index: 4, kind: output, shape index: {}]
  %s5 = sld [smem:[#allocation0]]
  $region46: #{tpu_custom_call.1} parent=0
    _
  %s7 = ssub.s32 1, %s5
  %s8 = scalar_select 0, %s7, %s5
  $region1: #{tpu_custom_call.1} parent=0
    #allocation3 [shape = 'u8[131072]{0}', space=vmem, size = 0x20000, scoped, tag = 'input window, operand 0, single buffered']
    #allocation4 [shape = 's32[1]{0}', space=sflag, size = 0x4, scoped, tag = 'scoped memory for tpu_custom_call.1']
    #allocation5 [shape = 's32[1]{0}', space=sflag, size = 0x4, scoped, tag = 'scoped memory for tpu_custom_call.1']
    #allocation6 [shape = 'u8[65536]{0}', space=vmem, size = 0x10000, scoped, tag = 'input window, operand 1, single buffered']
    #allocation7 [shape = 's32[1]{0}', space=sflag, size = 0x4, scoped, tag = 'scoped memory for tpu_custom_call.1']
    #allocation8 [shape = 'u8[32768]{0}', space=vmem, size = 0x8000, scoped, tag = 'input window, operand 2, single buffered']
    #allocation9 [shape = 'u8[65536]{0}', space=vmem, size = 0x10000, scoped, tag = 'output window, operand 0, single buffered']
    %9 = vsyncpa [#allocation4], 0
    %10 = vsyncpa [#allocation7], 0
    %11 = vsyncpa [#allocation5], 0
    // Predicated region
    $region2: #{tpu_custom_call.1} parent=1 // pred_check
      _
    $region3: #{tpu_custom_call.1} parent=1 // pred_check_branch
      %13 = sbr.rel (0) target = $region5
    $region4: #{tpu_custom_call.1} parent=1 // pred_region
      %s15 = ssub.s32 4096, 4096
      %16 = vsyncadd [#allocation4], %s15
      %s17 = sshll.u32 [#allocation3], 4
      %s18 = int_to_ptr.vmem [resolvable:$true] %s17
      %23 = dma.hbm_to_vmem [thread:$0]  %s0, 4096, %s18, [#allocation4], 128, 128, 8
    $region5: #{tpu_custom_call.1} parent=1 // pred_fallthru
      _
    // Predicated region
    $region6: #{tpu_custom_call.1} parent=1 // pred_check
      _
    $region7: #{tpu_custom_call.1} parent=1 // pred_check_branch
      %25 = sbr.rel (0) target = $region9
    $region8: #{tpu_custom_call.1} parent=1 // pred_region
      %s27 = ssub.s32 2048, 2048
      %28 = vsyncadd [#allocation7], %s27
      %s29 = sshll.u32 [#allocation6], 4
      %s30 = int_to_ptr.vmem [resolvable:$true] %s29
      %35 = dma.hbm_to_vmem [thread:$0]  %s1, 2048, %s30, [#allocation7], 64, 64, 4
    $region9: #{tpu_custom_call.1} parent=1 // pred_fallthru
      _
    // Predicated region
    $region10: #{tpu_custom_call.1} parent=1 // pred_check
      _
    $region11: #{tpu_custom_call.1} parent=1 // pred_check_branch
      %37 = sbr.rel (0) target = $region13
    $region12: #{tpu_custom_call.1} parent=1 // pred_region
      %s39 = ssub.s32 1024, 1024
      %40 = vsyncadd [#allocation7], %s39
      %s41 = sshll.u32 [#allocation8], 4
      %s42 = int_to_ptr.vmem [resolvable:$true] %s41
      %47 = dma.hbm_to_vmem [thread:$0]  %s2, 1024, %s42, [#allocation7], 64, 64, 4
    $region13: #{tpu_custom_call.1} parent=1 // pred_fallthru
      _
    // Predicated region
    $region14: #{tpu_custom_call.1} parent=1 // pred_check
      _
    $region15: #{tpu_custom_call.1} parent=1 // pred_check_branch
      %49 = sbr.rel (0) target = $region17
    $region16: #{tpu_custom_call.1} parent=1 // pred_region
      _
    $region17: #{tpu_custom_call.1} parent=1 // pred_fallthru
      _
    // Predicated region
    $region18: #{tpu_custom_call.1} parent=1 // pred_check
      _
    $region19: #{tpu_custom_call.1} parent=1 // pred_check_branch
      %51 = sbr.rel (0) target = $region21
    $region20: #{tpu_custom_call.1} parent=1 // pred_region
      %52 = dma.done [#allocation4], 4096
    $region21: #{tpu_custom_call.1} parent=1 // pred_fallthru
      _
    // Predicated region
    $region22: #{tpu_custom_call.1} parent=1 // pred_check
      _
    $region23: #{tpu_custom_call.1} parent=1 // pred_check_branch
      %54 = sbr.rel (0) target = $region25
    $region24: #{tpu_custom_call.1} parent=1 // pred_region
      %55 = dma.done [#allocation7], 2048
    $region25: #{tpu_custom_call.1} parent=1 // pred_fallthru
      _
    // Predicated region
    $region26: #{tpu_custom_call.1} parent=1 // pred_check
      _
    $region27: #{tpu_custom_call.1} parent=1 // pred_check_branch
      %57 = sbr.rel (0) target = $region29
    $region28: #{tpu_custom_call.1} parent=1 // pred_region
      %58 = dma.done [#allocation7], 1024
    $region29: #{tpu_custom_call.1} parent=1 // pred_fallthru
      _
    %p60 = scmp.eq.s32.totalorder 0, 0
    // Predicated region
    $region30: #{tpu_custom_call.1} parent=1 // pred_check
      %p61 = pneg %p60
    $region31: #{tpu_custom_call.1} parent=1 // pred_check_branch
      %63 = sbr.rel (%p61) target = $region33
    $region32: #{tpu_custom_call.1} parent=1 // pred_region
      %64 = vst [vmem:[#allocation2] sm:$0xff] 0.0
      %65 = vst [vmem:[#allocation2 + $0x8] sm:$0xff] 0.0
      %66 = vst [vmem:[#allocation2 + $0x10] sm:$0xff] 0.0
      %67 = vst [vmem:[#allocation2 + $0x18] sm:$0xff] 0.0
      %68 = vst [vmem:[#allocation2 + $0x20] sm:$0xff] 0.0
      %69 = vst [vmem:[#allocation2 + $0x28] sm:$0xff] 0.0
      %70 = vst [vmem:[#allocation2 + $0x30] sm:$0xff] 0.0
      %71 = vst [vmem:[#allocation2 + $0x38] sm:$0xff] 0.0
      %72 = vst [vmem:[#allocation2 + $0x40] sm:$0xff] 0.0
      %73 = vst [vmem:[#allocation2 + $0x48] sm:$0xff] 0.0
      %74 = vst [vmem:[#allocation2 + $0x50] sm:$0xff] 0.0
      %75 = vst [vmem:[#allocation2 + $0x58] sm:$0xff] 0.0
      %76 = vst [vmem:[#allocation2 + $0x60] sm:$0xff] 0.0
      %77 = vst [vmem:[#allocation2 + $0x68] sm:$0xff] 0.0
      %78 = vst [vmem:[#allocation2 + $0x70] sm:$0xff] 0.0
      %79 = vst [vmem:[#allocation2 + $0x78] sm:$0xff] 0.0
      %80 = vst [vmem:[#allocation2 + $0x80] sm:$0xff] 0.0
      %81 = vst [vmem:[#allocation2 + $0x88] sm:$0xff] 0.0
      %82 = vst [vmem:[#allocation2 + $0x90] sm:$0xff] 0.0
      %83 = vst [vmem:[#allocation2 + $0x98] sm:$0xff] 0.0
      %84 = vst [vmem:[#allocation2 + $0xa0] sm:$0xff] 0.0
      %85 = vst [vmem:[#allocation2 + $0xa8] sm:$0xff] 0.0
      %86 = vst [vmem:[#allocation2 + $0xb0] sm:$0xff] 0.0
      %87 = vst [vmem:[#allocation2 + $0xb8] sm:$0xff] 0.0
      %88 = vst [vmem:[#allocation2 + $0xc0] sm:$0xff] 0.0
      %89 = vst [vmem:[#allocation2 + $0xc8] sm:$0xff] 0.0
      %90 = vst [vmem:[#allocation2 + $0xd0] sm:$0xff] 0.0
      %91 = vst [vmem:[#allocation2 + $0xd8] sm:$0xff] 0.0
      %92 = vst [vmem:[#allocation2 + $0xe0] sm:$0xff] 0.0
      %93 = vst [vmem:[#allocation2 + $0xe8] sm:$0xff] 0.0
      %94 = vst [vmem:[#allocation2 + $0xf0] sm:$0xff] 0.0
      %95 = vst [vmem:[#allocation2 + $0xf8] sm:$0xff] 0.0
    $region33: #{tpu_custom_call.1} parent=1 // pred_fallthru
      _
    %v96 = vld [vmem:[#allocation2] sm:$0xff]
    %v97 = vld [vmem:[#allocation2 + $0x8] sm:$0xff]
    %v98 = vld [vmem:[#allocation2 + $0x10] sm:$0xff]
    %v99 = vld [vmem:[#allocation2 + $0x18] sm:$0xff]
    %v100 = vld [vmem:[#allocation2 + $0x20] sm:$0xff]
    %v101 = vld [vmem:[#allocation2 + $0x28] sm:$0xff]
    %v102 = vld [vmem:[#allocation2 + $0x30] sm:$0xff]
    %v103 = vld [vmem:[#allocation2 + $0x38] sm:$0xff]
    %v104 = vld [vmem:[#allocation2 + $0x40] sm:$0xff]
    %v105 = vld [vmem:[#allocation2 + $0x48] sm:$0xff]
    %v106 = vld [vmem:[#allocation2 + $0x50] sm:$0xff]
    %v107 = vld [vmem:[#allocation2 + $0x58] sm:$0xff]
    %v108 = vld [vmem:[#allocation2 + $0x60] sm:$0xff]
    %v109 = vld [vmem:[#allocation2 + $0x68] sm:$0xff]
    %v110 = vld [vmem:[#allocation2 + $0x70] sm:$0xff]
    %v111 = vld [vmem:[#allocation2 + $0x78] sm:$0xff]
    %v112 = vld [vmem:[#allocation2 + $0x80] sm:$0xff]
    %v113 = vld [vmem:[#allocation2 + $0x88] sm:$0xff]
    %v114 = vld [vmem:[#allocation2 + $0x90] sm:$0xff]
    %v115 = vld [vmem:[#allocation2 + $0x98] sm:$0xff]
    %v116 = vld [vmem:[#allocation2 + $0xa0] sm:$0xff]
    %v117 = vld [vmem:[#allocation2 + $0xa8] sm:$0xff]
    %v118 = vld [vmem:[#allocation2 + $0xb0] sm:$0xff]
    %v119 = vld [vmem:[#allocation2 + $0xb8] sm:$0xff]
    %v120 = vld [vmem:[#allocation2 + $0xc0] sm:$0xff]
    %v121 = vld [vmem:[#allocation2 + $0xc8] sm:$0xff]
    %v122 = vld [vmem:[#allocation2 + $0xd0] sm:$0xff]
    %v123 = vld [vmem:[#allocation2 + $0xd8] sm:$0xff]
    %v124 = vld [vmem:[#allocation2 + $0xe0] sm:$0xff]
    %v125 = vld [vmem:[#allocation2 + $0xe8] sm:$0xff]
    %v126 = vld [vmem:[#allocation2 + $0xf0] sm:$0xff]
    %v127 = vld [vmem:[#allocation2 + $0xf8] sm:$0xff]
    %v128 = vld [vmem:[#allocation3] sm:$0xff]
    %v129 = vld [vmem:[#allocation3 + $0x8] sm:$0xff]
    %v130 = vld [vmem:[#allocation3 + $0x10] sm:$0xff]
    %v131 = vld [vmem:[#allocation3 + $0x18] sm:$0xff]
    %v132 = vld [vmem:[#allocation3 + $0x20] sm:$0xff]
    %v133 = vld [vmem:[#allocation3 + $0x28] sm:$0xff]
    %v134 = vld [vmem:[#allocation3 + $0x30] sm:$0xff]
    %v135 = vld [vmem:[#allocation3 + $0x38] sm:$0xff]
    %v136 = vld [vmem:[#allocation3 + $0x40] sm:$0xff]
    %v137 = vld [vmem:[#allocation3 + $0x48] sm:$0xff]
    %v138 = vld [vmem:[#allocation3 + $0x50] sm:$0xff]
    %v139 = vld [vmem:[#allocation3 + $0x58] sm:$0xff]
    %v140 = vld [vmem:[#allocation3 + $0x60] sm:$0xff]
    %v141 = vld [vmem:[#allocation3 + $0x68] sm:$0xff]
    %v142 = vld [vmem:[#allocation3 + $0x70] sm:$0xff]
    %v143 = vld [vmem:[#allocation3 + $0x78] sm:$0xff]
    %v144 = vld [vmem:[#allocation3 + $0x80] sm:$0xff]
    %v145 = vld [vmem:[#allocation3 + $0x88] sm:$0xff]
    %v146 = vld [vmem:[#allocation3 + $0x90] sm:$0xff]
    %v147 = vld [vmem:[#allocation3 + $0x98] sm:$0xff]
    %v148 = vld [vmem:[#allocation3 + $0xa0] sm:$0xff]
    %v149 = vld [vmem:[#allocation3 + $0xa8] sm:$0xff]
    %v150 = vld [vmem:[#allocation3 + $0xb0] sm:$0xff]
    %v151 = vld [vmem:[#allocation3 + $0xb8] sm:$0xff]
    %v152 = vld [vmem:[#allocation3 + $0xc0] sm:$0xff]
    %v153 = vld [vmem:[#allocation3 + $0xc8] sm:$0xff]
    %v154 = vld [vmem:[#allocation3 + $0xd0] sm:$0xff]
    %v155 = vld [vmem:[#allocation3 + $0xd8] sm:$0xff]
    %v156 = vld [vmem:[#allocation3 + $0xe0] sm:$0xff]
    %v157 = vld [vmem:[#allocation3 + $0xe8] sm:$0xff]
    %v158 = vld [vmem:[#allocation3 + $0xf0] sm:$0xff]
    %v159 = vld [vmem:[#allocation3 + $0xf8] sm:$0xff]
    %v160 = vld [vmem:[#allocation6] sm:$0xf]
    %v161 = vld [vmem:[#allocation6 + $0x4] sm:$0xf]
    %v162 = vld [vmem:[#allocation6 + $0x8] sm:$0xf]
    %v163 = vld [vmem:[#allocation6 + $0xc] sm:$0xf]
    %v164 = vld [vmem:[#allocation6 + $0x10] sm:$0xf]
    %v165 = vld [vmem:[#allocation6 + $0x14] sm:$0xf]
    %v166 = vld [vmem:[#allocation6 + $0x18] sm:$0xf]
    %v167 = vld [vmem:[#allocation6 + $0x1c] sm:$0xf]
    %v168 = vld [vmem:[#allocation6 + $0x20] sm:$0xf]
    %v169 = vld [vmem:[#allocation6 + $0x24] sm:$0xf]
    %v170 = vld [vmem:[#allocation6 + $0x28] sm:$0xf]
    %v171 = vld [vmem:[#allocation6 + $0x2c] sm:$0xf]
    %v172 = vld [vmem:[#allocation6 + $0x30] sm:$0xf]
    %v173 = vld [vmem:[#allocation6 + $0x34] sm:$0xf]
    %v174 = vld [vmem:[#allocation6 + $0x38] sm:$0xf]
    %v175 = vld [vmem:[#allocation6 + $0x3c] sm:$0xf]
    %v176 = vld [vmem:[#allocation6 + $0x40] sm:$0xf]
    %v177 = vld [vmem:[#allocation6 + $0x44] sm:$0xf]
    %v178 = vld [vmem:[#allocation6 + $0x48] sm:$0xf]
    %v179 = vld [vmem:[#allocation6 + $0x4c] sm:$0xf]
    %v180 = vld [vmem:[#allocation6 + $0x50] sm:$0xf]
    %v181 = vld [vmem:[#allocation6 + $0x54] sm:$0xf]
    %v182 = vld [vmem:[#allocation6 + $0x58] sm:$0xf]
    %v183 = vld [vmem:[#allocation6 + $0x5c] sm:$0xf]
    %v184 = vld [vmem:[#allocation6 + $0x60] sm:$0xf]
    %v185 = vld [vmem:[#allocation6 + $0x64] sm:$0xf]
    %v186 = vld [vmem:[#allocation6 + $0x68] sm:$0xf]
    %v187 = vld [vmem:[#allocation6 + $0x6c] sm:$0xf]
    %v188 = vld [vmem:[#allocation6 + $0x70] sm:$0xf]
    %v189 = vld [vmem:[#allocation6 + $0x74] sm:$0xf]
    %v190 = vld [vmem:[#allocation6 + $0x78] sm:$0xf]
    %v191 = vld [vmem:[#allocation6 + $0x7c] sm:$0xf]
    %v224 = vunpack.c.l.b16 %v128
    %v225 = vunpack.c.h.b16 %v128
    %v226 = vunpack.c.l.b16 %v129
    %v227 = vunpack.c.h.b16 %v129
    %v228 = vunpack.c.l.b16 %v130
    %v229 = vunpack.c.h.b16 %v130
    %v230 = vunpack.c.l.b16 %v131
    %v231 = vunpack.c.h.b16 %v131
    %v232 = vunpack.c.l.b16 %v132
    %v233 = vunpack.c.h.b16 %v132
    %v234 = vunpack.c.l.b16 %v133
    %v235 = vunpack.c.h.b16 %v133
    %v236 = vunpack.c.l.b16 %v134
    %v237 = vunpack.c.h.b16 %v134
    %v238 = vunpack.c.l.b16 %v135
    %v239 = vunpack.c.h.b16 %v135
    %v240 = vunpack.c.l.b16 %v136
    %v241 = vunpack.c.h.b16 %v136
    %v242 = vunpack.c.l.b16 %v137
    %v243 = vunpack.c.h.b16 %v137
    %v244 = vunpack.c.l.b16 %v138
    %v245 = vunpack.c.h.b16 %v138
    %v246 = vunpack.c.l.b16 %v139
    %v247 = vunpack.c.h.b16 %v139
    %v248 = vunpack.c.l.b16 %v140
    %v249 = vunpack.c.h.b16 %v140
    %v250 = vunpack.c.l.b16 %v141
    %v251 = vunpack.c.h.b16 %v141
    %v252 = vunpack.c.l.b16 %v142
    %v253 = vunpack.c.h.b16 %v142
    %v254 = vunpack.c.l.b16 %v143
    %v255 = vunpack.c.h.b16 %v143
    %v256 = vunpack.c.l.b16 %v144
    %v257 = vunpack.c.h.b16 %v144
    %v258 = vunpack.c.l.b16 %v145
    %v259 = vunpack.c.h.b16 %v145
    %v260 = vunpack.c.l.b16 %v146
    %v261 = vunpack.c.h.b16 %v146
    %v262 = vunpack.c.l.b16 %v147
    %v263 = vunpack.c.h.b16 %v147
    %v264 = vunpack.c.l.b16 %v148
    %v265 = vunpack.c.h.b16 %v148
    %v266 = vunpack.c.l.b16 %v149
    %v267 = vunpack.c.h.b16 %v149
    %v268 = vunpack.c.l.b16 %v150
    %v269 = vunpack.c.h.b16 %v150
    %v270 = vunpack.c.l.b16 %v151
    %v271 = vunpack.c.h.b16 %v151
    %v272 = vunpack.c.l.b16 %v152
    %v273 = vunpack.c.h.b16 %v152
    %v274 = vunpack.c.l.b16 %v153
    %v275 = vunpack.c.h.b16 %v153
    %v276 = vunpack.c.l.b16 %v154
    %v277 = vunpack.c.h.b16 %v154
    %v278 = vunpack.c.l.b16 %v155
    %v279 = vunpack.c.h.b16 %v155
    %v280 = vunpack.c.l.b16 %v156
    %v281 = vunpack.c.h.b16 %v156
    %v282 = vunpack.c.l.b16 %v157
    %v283 = vunpack.c.h.b16 %v157
    %v284 = vunpack.c.l.b16 %v158
    %v285 = vunpack.c.h.b16 %v158
    %v286 = vunpack.c.l.b16 %v159
    %v287 = vunpack.c.h.b16 %v159
    %v288 = vpack.c.b16 %v226, %v224
    %v289 = vpack.c.b16 %v227, %v225
    %v290 = vpack.c.b16 %v230, %v228
    %v291 = vpack.c.b16 %v231, %v229
    %v292 = vpack.c.b16 %v234, %v232
    %v293 = vpack.c.b16 %v235, %v233
    %v294 = vpack.c.b16 %v238, %v236
    %v295 = vpack.c.b16 %v239, %v237
    %v296 = vpack.c.b16 %v242, %v240
    %v297 = vpack.c.b16 %v243, %v241
    %v298 = vpack.c.b16 %v246, %v244
    %v299 = vpack.c.b16 %v247, %v245
    %v300 = vpack.c.b16 %v250, %v248
    %v301 = vpack.c.b16 %v251, %v249
    %v302 = vpack.c.b16 %v254, %v252
    %v303 = vpack.c.b16 %v255, %v253
    %v304 = vpack.c.b16 %v258, %v256
    %v305 = vpack.c.b16 %v259, %v257
    %v306 = vpack.c.b16 %v262, %v260
    %v307 = vpack.c.b16 %v263, %v261
    %v308 = vpack.c.b16 %v266, %v264
    %v309 = vpack.c.b16 %v267, %v265
    %v310 = vpack.c.b16 %v270, %v268
    %v311 = vpack.c.b16 %v271, %v269
    %v312 = vpack.c.b16 %v274, %v272
    %v313 = vpack.c.b16 %v275, %v273
    %v314 = vpack.c.b16 %v278, %v276
    %v315 = vpack.c.b16 %v279, %v277
    %v316 = vpack.c.b16 %v282, %v280
    %v317 = vpack.c.b16 %v283, %v281
    %v318 = vpack.c.b16 %v286, %v284
    %v319 = vpack.c.b16 %v287, %v285
    %v384 = vunpack.c.l.b16 %v160
    %v385 = vunpack.c.l.b16 %v161
    %v386 = vunpack.c.l.b16 %v162
    %v387 = vunpack.c.l.b16 %v163
    %v388 = vunpack.c.l.b16 %v164
    %v389 = vunpack.c.l.b16 %v165
    %v390 = vunpack.c.l.b16 %v166
    %v391 = vunpack.c.l.b16 %v167
    %v392 = vunpack.c.l.b16 %v168
    %v393 = vunpack.c.l.b16 %v169
    %v394 = vunpack.c.l.b16 %v170
    %v395 = vunpack.c.l.b16 %v171
    %v396 = vunpack.c.l.b16 %v172
    %v397 = vunpack.c.l.b16 %v173
    %v398 = vunpack.c.l.b16 %v174
    %v399 = vunpack.c.l.b16 %v175
    %v400 = vunpack.c.l.b16 %v176
    %v401 = vunpack.c.l.b16 %v177
    %v402 = vunpack.c.l.b16 %v178
    %v403 = vunpack.c.l.b16 %v179
    %v404 = vunpack.c.l.b16 %v180
    %v405 = vunpack.c.l.b16 %v181
    %v406 = vunpack.c.l.b16 %v182
    %v407 = vunpack.c.l.b16 %v183
    %v408 = vunpack.c.l.b16 %v184
    %v409 = vunpack.c.l.b16 %v185
    %v410 = vunpack.c.l.b16 %v186
    %v411 = vunpack.c.l.b16 %v187
    %v412 = vunpack.c.l.b16 %v188
    %v413 = vunpack.c.l.b16 %v189
    %v414 = vunpack.c.l.b16 %v190
    %v415 = vunpack.c.l.b16 %v191
    %v416 = vpack.c.b16 %v385, %v384
    %v417 = vpack.c.b16 %v387, %v386
    %v418 = vpack.c.b16 %v389, %v388
    %v419 = vpack.c.b16 %v391, %v390
    %v420 = vpack.c.b16 %v393, %v392
    %v421 = vpack.c.b16 %v395, %v394
    %v422 = vpack.c.b16 %v397, %v396
    %v423 = vpack.c.b16 %v399, %v398
    %v424 = vpack.c.b16 %v401, %v400
    %v425 = vpack.c.b16 %v403, %v402
    %v426 = vpack.c.b16 %v405, %v404
    %v427 = vpack.c.b16 %v407, %v406
    %v428 = vpack.c.b16 %v409, %v408
    %v429 = vpack.c.b16 %v411, %v410
    %v430 = vpack.c.b16 %v413, %v412
    %v431 = vpack.c.b16 %v415, %v414
    %448 = vmatprep.subr.bf16.mxu0 0
    %449 = vmatpush1.bf16.msra.mxu0 %v416
    %450 = vmatprep.subr.bf16.mxu0 0
    %451 = vmatpush1.bf16.msra.mxu0 %v417
    %452 = vmatprep.subr.bf16.mxu0 0
    %453 = vmatpush1.bf16.msra.mxu0 %v418
    %454 = vmatprep.subr.bf16.mxu0 0
    %455 = vmatpush1.bf16.msra.mxu0 %v419
    %456 = vmatprep.subr.bf16.mxu0 0
    %457 = vmatpush1.bf16.msra.mxu0 %v420
    %458 = vmatprep.subr.bf16.mxu0 0
    %459 = vmatpush1.bf16.msra.mxu0 %v421
    %460 = vmatprep.subr.bf16.mxu0 0
    %461 = vmatpush1.bf16.msra.mxu0 %v422
    %462 = vmatprep.subr.bf16.mxu0 0
    %463 = vmatpush1.bf16.msra.mxu0 %v423
    %464 = vmatprep.subr.bf16.mxu0 0
    %465 = vmatpush1.bf16.msra.mxu0 %v424
    %466 = vmatprep.subr.bf16.mxu0 0
    %467 = vmatpush1.bf16.msra.mxu0 %v425
    %468 = vmatprep.subr.bf16.mxu0 0
    %469 = vmatpush1.bf16.msra.mxu0 %v426
    %470 = vmatprep.subr.bf16.mxu0 0
    %471 = vmatpush1.bf16.msra.mxu0 %v427
    %472 = vmatprep.subr.bf16.mxu0 0
    %473 = vmatpush1.bf16.msra.mxu0 %v428
    %474 = vmatprep.subr.bf16.mxu0 0
    %475 = vmatpush1.bf16.msra.mxu0 %v429
    %476 = vmatprep.subr.bf16.mxu0 0
    %477 = vmatpush1.bf16.msra.mxu0 %v430
    %478 = vmatprep.subr.bf16.mxu0 0
    %479 = vmatpush1.bf16.msra.mxu0 %v431
    %480 = vmatprep.mubr.bf16.mxu0 %v289
    %481 = vmatmul.mubr.bf16.gmra.mrb[0].mxu0 %v288
    %v482 = vpop.f32.mrb[0].mxu0
    %v483 = vadd.f32 0.0, %v482
    %v484 = vpop.f32.mrb[0].mxu0
    %v485 = vpop.f32.mrb[0].mxu0
    %v486 = vadd.f32 0.0, %v485
    %v487 = vpop.f32.mrb[0].mxu0
    %488 = vmatprep.mubr.bf16.mxu0 %v291
    %489 = vmatmul.mubr.bf16.gmra.mrb[0].mxu0 %v290
    %v490 = vpop.f32.mrb[0].mxu0
    %v491 = vadd.f32 0.0, %v490
    %v492 = vpop.f32.mrb[0].mxu0
    %v493 = vpop.f32.mrb[0].mxu0
    %v494 = vadd.f32 0.0, %v493
    %v495 = vpop.f32.mrb[0].mxu0
    %496 = vmatprep.mubr.bf16.mxu0 %v293
    %497 = vmatmul.mubr.bf16.gmra.mrb[0].mxu0 %v292
    %v498 = vpop.f32.mrb[0].mxu0
    %v499 = vadd.f32 0.0, %v498
    %v500 = vpop.f32.mrb[0].mxu0
    %v501 = vpop.f32.mrb[0].mxu0
    %v502 = vadd.f32 0.0, %v501
    %v503 = vpop.f32.mrb[0].mxu0
    %504 = vmatprep.mubr.bf16.mxu0 %v295
    %505 = vmatmul.mubr.bf16.gmra.mrb[0].mxu0 %v294
    %v506 = vpop.f32.mrb[0].mxu0
    %v507 = vadd.f32 0.0, %v506
    %v508 = vpop.f32.mrb[0].mxu0
    %v509 = vpop.f32.mrb[0].mxu0
    %v510 = vadd.f32 0.0, %v509
    %v511 = vpop.f32.mrb[0].mxu0
    %512 = vmatprep.mubr.bf16.mxu0 %v297
    %513 = vmatmul.mubr.bf16.gmra.mrb[0].mxu0 %v296
    %v514 = vpop.f32.mrb[0].mxu0
    %v515 = vadd.f32 0.0, %v514
    %v516 = vpop.f32.mrb[0].mxu0
    %v517 = vpop.f32.mrb[0].mxu0
    %v518 = vadd.f32 0.0, %v517
    %v519 = vpop.f32.mrb[0].mxu0
    %520 = vmatprep.mubr.bf16.mxu0 %v299
    %521 = vmatmul.mubr.bf16.gmra.mrb[0].mxu0 %v298
    %v522 = vpop.f32.mrb[0].mxu0
    %v523 = vadd.f32 0.0, %v522
    %v524 = vpop.f32.mrb[0].mxu0
    %v525 = vpop.f32.mrb[0].mxu0
    %v526 = vadd.f32 0.0, %v525
    %v527 = vpop.f32.mrb[0].mxu0
    %528 = vmatprep.mubr.bf16.mxu0 %v301
    %529 = vmatmul.mubr.bf16.gmra.mrb[0].mxu0 %v300
    %v530 = vpop.f32.mrb[0].mxu0
    %v531 = vadd.f32 0.0, %v530
    %v532 = vpop.f32.mrb[0].mxu0
    %v533 = vpop.f32.mrb[0].mxu0
    %v534 = vadd.f32 0.0, %v533
    %v535 = vpop.f32.mrb[0].mxu0
    %536 = vmatprep.mubr.bf16.mxu0 %v303
    %537 = vmatmul.mubr.bf16.gmra.mrb[0].mxu0 %v302
    %v538 = vpop.f32.mrb[0].mxu0
    %v539 = vadd.f32 0.0, %v538
    %v540 = vpop.f32.mrb[0].mxu0
    %v541 = vpop.f32.mrb[0].mxu0
    %v542 = vadd.f32 0.0, %v541
    %v543 = vpop.f32.mrb[0].mxu0
    %544 = vmatprep.mubr.bf16.mxu0 %v305
    %545 = vmatmul.mubr.bf16.gmra.mrb[0].mxu0 %v304
    %v546 = vpop.f32.mrb[0].mxu0
    %v547 = vadd.f32 0.0, %v546
    %v548 = vpop.f32.mrb[0].mxu0
    %v549 = vpop.f32.mrb[0].mxu0
    %v550 = vadd.f32 0.0, %v549
    %v551 = vpop.f32.mrb[0].mxu0
    %552 = vmatprep.mubr.bf16.mxu0 %v307
    %553 = vmatmul.mubr.bf16.gmra.mrb[0].mxu0 %v306
    %v554 = vpop.f32.mrb[0].mxu0
    %v555 = vadd.f32 0.0, %v554
    %v556 = vpop.f32.mrb[0].mxu0
    %v557 = vpop.f32.mrb[0].mxu0
    %v558 = vadd.f32 0.0, %v557
    %v559 = vpop.f32.mrb[0].mxu0
    %560 = vmatprep.mubr.bf16.mxu0 %v309
    %561 = vmatmul.mubr.bf16.gmra.mrb[0].mxu0 %v308
    %v562 = vpop.f32.mrb[0].mxu0
    %v563 = vadd.f32 0.0, %v562
    %v564 = vpop.f32.mrb[0].mxu0
    %v565 = vpop.f32.mrb[0].mxu0
    %v566 = vadd.f32 0.0, %v565
    %v567 = vpop.f32.mrb[0].mxu0
    %568 = vmatprep.mubr.bf16.mxu0 %v311
    %569 = vmatmul.mubr.bf16.gmra.mrb[0].mxu0 %v310
    %v570 = vpop.f32.mrb[0].mxu0
    %v571 = vadd.f32 0.0, %v570
    %v572 = vpop.f32.mrb[0].mxu0
    %v573 = vpop.f32.mrb[0].mxu0
    %v574 = vadd.f32 0.0, %v573
    %v575 = vpop.f32.mrb[0].mxu0
    %576 = vmatprep.mubr.bf16.mxu0 %v313
    %577 = vmatmul.mubr.bf16.gmra.mrb[0].mxu0 %v312
    %v578 = vpop.f32.mrb[0].mxu0
    %v579 = vadd.f32 0.0, %v578
    %v580 = vpop.f32.mrb[0].mxu0
    %v581 = vpop.f32.mrb[0].mxu0
    %v582 = vadd.f32 0.0, %v581
    %v583 = vpop.f32.mrb[0].mxu0
    %584 = vmatprep.mubr.bf16.mxu0 %v315
    %585 = vmatmul.mubr.bf16.gmra.mrb[0].mxu0 %v314
    %v586 = vpop.f32.mrb[0].mxu0
    %v587 = vadd.f32 0.0, %v586
    %v588 = vpop.f32.mrb[0].mxu0
    %v589 = vpop.f32.mrb[0].mxu0
    %v590 = vadd.f32 0.0, %v589
    %v591 = vpop.f32.mrb[0].mxu0
    %592 = vmatprep.mubr.bf16.mxu0 %v317
    %593 = vmatmul.mubr.bf16.gmra.mrb[0].mxu0 %v316
    %v594 = vpop.f32.mrb[0].mxu0
    %v595 = vadd.f32 0.0, %v594
    %v596 = vpop.f32.mrb[0].mxu0
    %v597 = vpop.f32.mrb[0].mxu0
    %v598 = vadd.f32 0.0, %v597
    %v599 = vpop.f32.mrb[0].mxu0
    %600 = vmatprep.mubr.bf16.mxu0 %v319
    %601 = vmatmul.mubr.bf16.gmra.mrb[0].mxu0 %v318
    %v602 = vpop.f32.mrb[0].mxu0
    %v603 = vadd.f32 0.0, %v602
    %v604 = vpop.f32.mrb[0].mxu0
    %v605 = vpop.f32.mrb[0].mxu0
    %v606 = vadd.f32 0.0, %v605
    %v607 = vpop.f32.mrb[0].mxu0
    %608 = vdwg.mxu0
    %v609 = vadd.f32 %v96, %v483
    %v610 = vadd.f32 %v97, %v486
    %v611 = vadd.f32 %v98, %v491
    %v612 = vadd.f32 %v99, %v494
    %v613 = vadd.f32 %v100, %v499
    %v614 = vadd.f32 %v101, %v502
    %v615 = vadd.f32 %v102, %v507
    %v616 = vadd.f32 %v103, %v510
    %v617 = vadd.f32 %v104, %v515
    %v618 = vadd.f32 %v105, %v518
    %v619 = vadd.f32 %v106, %v523
    %v620 = vadd.f32 %v107, %v526
    %v621 = vadd.f32 %v108, %v531
    %v622 = vadd.f32 %v109, %v534
    %v623 = vadd.f32 %v110, %v539
    %v624 = vadd.f32 %v111, %v542
    %v625 = vadd.f32 %v112, %v547
    %v626 = vadd.f32 %v113, %v550
    %v627 = vadd.f32 %v114, %v555
    %v628 = vadd.f32 %v115, %v558
    %v629 = vadd.f32 %v116, %v563
    %v630 = vadd.f32 %v117, %v566
    %v631 = vadd.f32 %v118, %v571
    %v632 = vadd.f32 %v119, %v574
    %v633 = vadd.f32 %v120, %v579
    %v634 = vadd.f32 %v121, %v582
    %v635 = vadd.f32 %v122, %v587
    %v636 = vadd.f32 %v123, %v590
    %v637 = vadd.f32 %v124, %v595
    %v638 = vadd.f32 %v125, %v598
    %v639 = vadd.f32 %v126, %v603
    %v640 = vadd.f32 %v127, %v606
    %641 = vst [vmem:[#allocation2] sm:$0xff] %v609
    %642 = vst [vmem:[#allocation2 + $0x8] sm:$0xff] %v610
    %643 = vst [vmem:[#allocation2 + $0x10] sm:$0xff] %v611
    %644 = vst [vmem:[#allocation2 + $0x18] sm:$0xff] %v612
    %645 = vst [vmem:[#allocation2 + $0x20] sm:$0xff] %v613
    %646 = vst [vmem:[#allocation2 + $0x28] sm:$0xff] %v614
    %647 = vst [vmem:[#allocation2 + $0x30] sm:$0xff] %v615
    %648 = vst [vmem:[#allocation2 + $0x38] sm:$0xff] %v616
    %649 = vst [vmem:[#allocation2 + $0x40] sm:$0xff] %v617
    %650 = vst [vmem:[#allocation2 + $0x48] sm:$0xff] %v618
    %651 = vst [vmem:[#allocation2 + $0x50] sm:$0xff] %v619
    %652 = vst [vmem:[#allocation2 + $0x58] sm:$0xff] %v620
    %653 = vst [vmem:[#allocation2 + $0x60] sm:$0xff] %v621
    %654 = vst [vmem:[#allocation2 + $0x68] sm:$0xff] %v622
    %655 = vst [vmem:[#allocation2 + $0x70] sm:$0xff] %v623
    %656 = vst [vmem:[#allocation2 + $0x78] sm:$0xff] %v624
    %657 = vst [vmem:[#allocation2 + $0x80] sm:$0xff] %v625
    %658 = vst [vmem:[#allocation2 + $0x88] sm:$0xff] %v626
    %659 = vst [vmem:[#allocation2 + $0x90] sm:$0xff] %v627
    %660 = vst [vmem:[#allocation2 + $0x98] sm:$0xff] %v628
    %661 = vst [vmem:[#allocation2 + $0xa0] sm:$0xff] %v629
    %662 = vst [vmem:[#allocation2 + $0xa8] sm:$0xff] %v630
    %663 = vst [vmem:[#allocation2 + $0xb0] sm:$0xff] %v631
    %664 = vst [vmem:[#allocation2 + $0xb8] sm:$0xff] %v632
    %665 = vst [vmem:[#allocation2 + $0xc0] sm:$0xff] %v633
    %666 = vst [vmem:[#allocation2 + $0xc8] sm:$0xff] %v634
    %667 = vst [vmem:[#allocation2 + $0xd0] sm:$0xff] %v635
    %668 = vst [vmem:[#allocation2 + $0xd8] sm:$0xff] %v636
    %669 = vst [vmem:[#allocation2 + $0xe0] sm:$0xff] %v637
    %670 = vst [vmem:[#allocation2 + $0xe8] sm:$0xff] %v638
    %671 = vst [vmem:[#allocation2 + $0xf0] sm:$0xff] %v639
    %672 = vst [vmem:[#allocation2 + $0xf8] sm:$0xff] %v640
    // Predicated region
    $region34: #{tpu_custom_call.1} parent=1 // pred_check
      %p673 = pneg %p60
    $region35: #{tpu_custom_call.1} parent=1 // pred_check_branch
      %675 = sbr.rel (%p673) target = $region37
    $region36: #{tpu_custom_call.1} parent=1 // pred_region
      %v676 = vld [vmem:[#allocation2] sm:$0xff]
      %v677 = vld [vmem:[#allocation2 + $0x8] sm:$0xff]
      %v678 = vld [vmem:[#allocation2 + $0x10] sm:$0xff]
      %v679 = vld [vmem:[#allocation2 + $0x18] sm:$0xff]
      %v680 = vld [vmem:[#allocation2 + $0x20] sm:$0xff]
      %v681 = vld [vmem:[#allocation2 + $0x28] sm:$0xff]
      %v682 = vld [vmem:[#allocation2 + $0x30] sm:$0xff]
      %v683 = vld [vmem:[#allocation2 + $0x38] sm:$0xff]
      %v684 = vld [vmem:[#allocation2 + $0x40] sm:$0xff]
      %v685 = vld [vmem:[#allocation2 + $0x48] sm:$0xff]
      %v686 = vld [vmem:[#allocation2 + $0x50] sm:$0xff]
      %v687 = vld [vmem:[#allocation2 + $0x58] sm:$0xff]
      %v688 = vld [vmem:[#allocation2 + $0x60] sm:$0xff]
      %v689 = vld [vmem:[#allocation2 + $0x68] sm:$0xff]
      %v690 = vld [vmem:[#allocation2 + $0x70] sm:$0xff]
      %v691 = vld [vmem:[#allocation2 + $0x78] sm:$0xff]
      %v692 = vld [vmem:[#allocation2 + $0x80] sm:$0xff]
      %v693 = vld [vmem:[#allocation2 + $0x88] sm:$0xff]
      %v694 = vld [vmem:[#allocation2 + $0x90] sm:$0xff]
      %v695 = vld [vmem:[#allocation2 + $0x98] sm:$0xff]
      %v696 = vld [vmem:[#allocation2 + $0xa0] sm:$0xff]
      %v697 = vld [vmem:[#allocation2 + $0xa8] sm:$0xff]
      %v698 = vld [vmem:[#allocation2 + $0xb0] sm:$0xff]
      %v699 = vld [vmem:[#allocation2 + $0xb8] sm:$0xff]
      %v700 = vld [vmem:[#allocation2 + $0xc0] sm:$0xff]
      %v701 = vld [vmem:[#allocation2 + $0xc8] sm:$0xff]
      %v702 = vld [vmem:[#allocation2 + $0xd0] sm:$0xff]
      %v703 = vld [vmem:[#allocation2 + $0xd8] sm:$0xff]
      %v704 = vld [vmem:[#allocation2 + $0xe0] sm:$0xff]
      %v705 = vld [vmem:[#allocation2 + $0xe8] sm:$0xff]
      %v706 = vld [vmem:[#allocation2 + $0xf0] sm:$0xff]
      %v707 = vld [vmem:[#allocation2 + $0xf8] sm:$0xff]
      %v708 = vpack.c.bf16 %v677, %v676
      %v709 = vpack.c.bf16 %v679, %v678
      %v710 = vpack.c.bf16 %v681, %v680
      %v711 = vpack.c.bf16 %v683, %v682
      %v712 = vpack.c.bf16 %v685, %v684
      %v713 = vpack.c.bf16 %v687, %v686
      %v714 = vpack.c.bf16 %v689, %v688
      %v715 = vpack.c.bf16 %v691, %v690
      %v716 = vpack.c.bf16 %v693, %v692
      %v717 = vpack.c.bf16 %v695, %v694
      %v718 = vpack.c.bf16 %v697, %v696
      %v719 = vpack.c.bf16 %v699, %v698
      %v720 = vpack.c.bf16 %v701, %v700
      %v721 = vpack.c.bf16 %v703, %v702
      %v722 = vpack.c.bf16 %v705, %v704
      %v723 = vpack.c.bf16 %v707, %v706
      %v724 = vld [vmem:[#allocation8] sm:$0xf]
      %v725 = vld [vmem:[#allocation8 + $0x4] sm:$0xf]
      %v726 = vld [vmem:[#allocation8 + $0x8] sm:$0xf]
      %v727 = vld [vmem:[#allocation8 + $0xc] sm:$0xf]
      %v728 = vld [vmem:[#allocation8 + $0x10] sm:$0xf]
      %v729 = vld [vmem:[#allocation8 + $0x14] sm:$0xf]
      %v730 = vld [vmem:[#allocation8 + $0x18] sm:$0xf]
      %v731 = vld [vmem:[#allocation8 + $0x1c] sm:$0xf]
      %v732 = vld [vmem:[#allocation8 + $0x20] sm:$0xf]
      %v733 = vld [vmem:[#allocation8 + $0x24] sm:$0xf]
      %v734 = vld [vmem:[#allocation8 + $0x28] sm:$0xf]
      %v735 = vld [vmem:[#allocation8 + $0x2c] sm:$0xf]
      %v736 = vld [vmem:[#allocation8 + $0x30] sm:$0xf]
      %v737 = vld [vmem:[#allocation8 + $0x34] sm:$0xf]
      %v738 = vld [vmem:[#allocation8 + $0x38] sm:$0xf]
      %v739 = vld [vmem:[#allocation8 + $0x3c] sm:$0xf]
      %v740 = vld [vmem:[%s3] sm:$0x1]
      %v742 = vlaneseq
      %v743 = vshrl.u32 %v742, 7
      %v744 = vsub.s32 0, %v743
      %v745 = vrot.slane %v740, %v744
      %v763 = vunpack.c.l.b16 %v724
      %v764 = vunpack.c.l.b16 %v725
      %v765 = vunpack.c.l.b16 %v726
      %v766 = vunpack.c.l.b16 %v727
      %v767 = vunpack.c.l.b16 %v728
      %v768 = vunpack.c.l.b16 %v729
      %v769 = vunpack.c.l.b16 %v730
      %v770 = vunpack.c.l.b16 %v731
      %v771 = vunpack.c.l.b16 %v732
      %v772 = vunpack.c.l.b16 %v733
      %v773 = vunpack.c.l.b16 %v734
      %v774 = vunpack.c.l.b16 %v735
      %v775 = vunpack.c.l.b16 %v736
      %v776 = vunpack.c.l.b16 %v737
      %v777 = vunpack.c.l.b16 %v738
      %v778 = vunpack.c.l.b16 %v739
      %v779 = vpack.c.b16 %v764, %v763
      %v780 = vpack.c.b16 %v766, %v765
      %v781 = vpack.c.b16 %v768, %v767
      %v782 = vpack.c.b16 %v770, %v769
      %v783 = vpack.c.b16 %v772, %v771
      %v784 = vpack.c.b16 %v774, %v773
      %v785 = vpack.c.b16 %v776, %v775
      %v786 = vpack.c.b16 %v778, %v777
      %795 = vmatprep.subr.bf16.mxu0 0
      %796 = vmatpush1.bf16.msra.mxu0 %v779
      %797 = vmatprep.subr.bf16.mxu0 0
      %798 = vmatpush1.bf16.msra.mxu0 %v780
      %799 = vmatprep.subr.bf16.mxu0 0
      %800 = vmatpush1.bf16.msra.mxu0 %v781
      %801 = vmatprep.subr.bf16.mxu0 0
      %802 = vmatpush1.bf16.msra.mxu0 %v782
      %803 = vmatprep.subr.bf16.mxu0 0
      %804 = vmatpush1.bf16.msra.mxu0 %v783
      %805 = vmatprep.subr.bf16.mxu0 0
      %806 = vmatpush1.bf16.msra.mxu0 %v784
      %807 = vmatprep.subr.bf16.mxu0 0
      %808 = vmatpush1.bf16.msra.mxu0 %v785
      %809 = vmatprep.subr.bf16.mxu0 0
      %810 = vmatpush1.bf16.msra.mxu0 %v786
      %811 = vmatprep.subr.bf16.mxu0 0
      %812 = vmatpush1.bf16.msra.mxu0 0
      %813 = vmatprep.subr.bf16.mxu0 0
      %814 = vmatpush1.bf16.msra.mxu0 0
      %815 = vmatprep.subr.bf16.mxu0 0
      %816 = vmatpush1.bf16.msra.mxu0 0
      %817 = vmatprep.subr.bf16.mxu0 0
      %818 = vmatpush1.bf16.msra.mxu0 0
      %819 = vmatprep.subr.bf16.mxu0 0
      %820 = vmatpush1.bf16.msra.mxu0 0
      %821 = vmatprep.subr.bf16.mxu0 0
      %822 = vmatpush1.bf16.msra.mxu0 0
      %823 = vmatprep.subr.bf16.mxu0 0
      %824 = vmatpush1.bf16.msra.mxu0 0
      %825 = vmatprep.subr.bf16.mxu0 0
      %826 = vmatpush1.bf16.msra.mxu0 0
      %827 = vmatprep.mubr.bf16.mxu0 0
      %828 = vmatmul.mubr.bf16.gmra.mrb[0].mxu0 %v708
      %v829 = vpop.f32.mrb[0].mxu0
      %v830 = vadd.f32 %v745, %v829
      %v831 = vpop.f32.mrb[0].mxu0
      %v832 = vpop.f32.mrb[0].mxu0
      %v833 = vadd.f32 %v745, %v832
      %v834 = vpop.f32.mrb[0].mxu0
      %835 = vmatprep.mubr.bf16.mxu0 0
      %836 = vmatmul.mubr.bf16.gmra.mrb[0].mxu0 %v709
      %v837 = vpop.f32.mrb[0].mxu0
      %v838 = vadd.f32 %v745, %v837
      %v839 = vpop.f32.mrb[0].mxu0
      %v840 = vpop.f32.mrb[0].mxu0
      %v841 = vadd.f32 %v745, %v840
      %v842 = vpop.f32.mrb[0].mxu0
      %843 = vmatprep.mubr.bf16.mxu0 0
      %844 = vmatmul.mubr.bf16.gmra.mrb[0].mxu0 %v710
      %v845 = vpop.f32.mrb[0].mxu0
      %v846 = vadd.f32 %v745, %v845
      %v847 = vpop.f32.mrb[0].mxu0
      %v848 = vpop.f32.mrb[0].mxu0
      %v849 = vadd.f32 %v745, %v848
      %v850 = vpop.f32.mrb[0].mxu0
      %851 = vmatprep.mubr.bf16.mxu0 0
      %852 = vmatmul.mubr.bf16.gmra.mrb[0].mxu0 %v711
      %v853 = vpop.f32.mrb[0].mxu0
      %v854 = vadd.f32 %v745, %v853
      %v855 = vpop.f32.mrb[0].mxu0
      %v856 = vpop.f32.mrb[0].mxu0
      %v857 = vadd.f32 %v745, %v856
      %v858 = vpop.f32.mrb[0].mxu0
      %859 = vmatprep.mubr.bf16.mxu0 0
      %860 = vmatmul.mubr.bf16.gmra.mrb[0].mxu0 %v712
      %v861 = vpop.f32.mrb[0].mxu0
      %v862 = vadd.f32 %v745, %v861
      %v863 = vpop.f32.mrb[0].mxu0
      %v864 = vpop.f32.mrb[0].mxu0
      %v865 = vadd.f32 %v745, %v864
      %v866 = vpop.f32.mrb[0].mxu0
      %867 = vmatprep.mubr.bf16.mxu0 0
      %868 = vmatmul.mubr.bf16.gmra.mrb[0].mxu0 %v713
      %v869 = vpop.f32.mrb[0].mxu0
      %v870 = vadd.f32 %v745, %v869
      %v871 = vpop.f32.mrb[0].mxu0
      %v872 = vpop.f32.mrb[0].mxu0
      %v873 = vadd.f32 %v745, %v872
      %v874 = vpop.f32.mrb[0].mxu0
      %875 = vmatprep.mubr.bf16.mxu0 0
      %876 = vmatmul.mubr.bf16.gmra.mrb[0].mxu0 %v714
      %v877 = vpop.f32.mrb[0].mxu0
      %v878 = vadd.f32 %v745, %v877
      %v879 = vpop.f32.mrb[0].mxu0
      %v880 = vpop.f32.mrb[0].mxu0
      %v881 = vadd.f32 %v745, %v880
      %v882 = vpop.f32.mrb[0].mxu0
      %883 = vmatprep.mubr.bf16.mxu0 0
      %884 = vmatmul.mubr.bf16.gmra.mrb[0].mxu0 %v715
      %v885 = vpop.f32.mrb[0].mxu0
      %v886 = vadd.f32 %v745, %v885
      %v887 = vpop.f32.mrb[0].mxu0
      %v888 = vpop.f32.mrb[0].mxu0
      %v889 = vadd.f32 %v745, %v888
      %v890 = vpop.f32.mrb[0].mxu0
      %891 = vmatprep.mubr.bf16.mxu0 0
      %892 = vmatmul.mubr.bf16.gmra.mrb[0].mxu0 %v716
      %v893 = vpop.f32.mrb[0].mxu0
      %v894 = vadd.f32 %v745, %v893
      %v895 = vpop.f32.mrb[0].mxu0
      %v896 = vpop.f32.mrb[0].mxu0
      %v897 = vadd.f32 %v745, %v896
      %v898 = vpop.f32.mrb[0].mxu0
      %899 = vmatprep.mubr.bf16.mxu0 0
      %900 = vmatmul.mubr.bf16.gmra.mrb[0].mxu0 %v717
      %v901 = vpop.f32.mrb[0].mxu0
      %v902 = vadd.f32 %v745, %v901
      %v903 = vpop.f32.mrb[0].mxu0
      %v904 = vpop.f32.mrb[0].mxu0
      %v905 = vadd.f32 %v745, %v904
      %v906 = vpop.f32.mrb[0].mxu0
      %907 = vmatprep.mubr.bf16.mxu0 0
      %908 = vmatmul.mubr.bf16.gmra.mrb[0].mxu0 %v718
      %v909 = vpop.f32.mrb[0].mxu0
      %v910 = vadd.f32 %v745, %v909
      %v911 = vpop.f32.mrb[0].mxu0
      %v912 = vpop.f32.mrb[0].mxu0
      %v913 = vadd.f32 %v745, %v912
      %v914 = vpop.f32.mrb[0].mxu0
      %915 = vmatprep.mubr.bf16.mxu0 0
      %916 = vmatmul.mubr.bf16.gmra.mrb[0].mxu0 %v719
      %v917 = vpop.f32.mrb[0].mxu0
      %v918 = vadd.f32 %v745, %v917
      %v919 = vpop.f32.mrb[0].mxu0
      %v920 = vpop.f32.mrb[0].mxu0
      %v921 = vadd.f32 %v745, %v920
      %v922 = vpop.f32.mrb[0].mxu0
      %923 = vmatprep.mubr.bf16.mxu0 0
      %924 = vmatmul.mubr.bf16.gmra.mrb[0].mxu0 %v720
      %v925 = vpop.f32.mrb[0].mxu0
      %v926 = vadd.f32 %v745, %v925
      %v927 = vpop.f32.mrb[0].mxu0
      %v928 = vpop.f32.mrb[0].mxu0
      %v929 = vadd.f32 %v745, %v928
      %v930 = vpop.f32.mrb[0].mxu0
      %931 = vmatprep.mubr.bf16.mxu0 0
      %932 = vmatmul.mubr.bf16.gmra.mrb[0].mxu0 %v721
      %v933 = vpop.f32.mrb[0].mxu0
      %v934 = vadd.f32 %v745, %v933
      %v935 = vpop.f32.mrb[0].mxu0
      %v936 = vpop.f32.mrb[0].mxu0
      %v937 = vadd.f32 %v745, %v936
      %v938 = vpop.f32.mrb[0].mxu0
      %939 = vmatprep.mubr.bf16.mxu0 0
      %940 = vmatmul.mubr.bf16.gmra.mrb[0].mxu0 %v722
      %v941 = vpop.f32.mrb[0].mxu0
      %v942 = vadd.f32 %v745, %v941
      %v943 = vpop.f32.mrb[0].mxu0
      %v944 = vpop.f32.mrb[0].mxu0
      %v945 = vadd.f32 %v745, %v944
      %v946 = vpop.f32.mrb[0].mxu0
      %947 = vmatprep.mubr.bf16.mxu0 0
      %948 = vmatmul.mubr.bf16.gmra.mrb[0].mxu0 %v723
      %v949 = vpop.f32.mrb[0].mxu0
      %v950 = vadd.f32 %v745, %v949
      %v951 = vpop.f32.mrb[0].mxu0
      %v952 = vpop.f32.mrb[0].mxu0
      %v953 = vadd.f32 %v745, %v952
      %v954 = vpop.f32.mrb[0].mxu0
      %955 = vdwg.mxu0
      %v956 = vmax.f32 %v830, 0.0
      %v957 = vmax.f32 %v833, 0.0
      %v958 = vmax.f32 %v838, 0.0
      %v959 = vmax.f32 %v841, 0.0
      %v960 = vmax.f32 %v846, 0.0
      %v961 = vmax.f32 %v849, 0.0
      %v962 = vmax.f32 %v854, 0.0
      %v963 = vmax.f32 %v857, 0.0
      %v964 = vmax.f32 %v862, 0.0
      %v965 = vmax.f32 %v865, 0.0
      %v966 = vmax.f32 %v870, 0.0
      %v967 = vmax.f32 %v873, 0.0
      %v968 = vmax.f32 %v878, 0.0
      %v969 = vmax.f32 %v881, 0.0
      %v970 = vmax.f32 %v886, 0.0
      %v971 = vmax.f32 %v889, 0.0
      %v972 = vmax.f32 %v894, 0.0
      %v973 = vmax.f32 %v897, 0.0
      %v974 = vmax.f32 %v902, 0.0
      %v975 = vmax.f32 %v905, 0.0
      %v976 = vmax.f32 %v910, 0.0
      %v977 = vmax.f32 %v913, 0.0
      %v978 = vmax.f32 %v918, 0.0
      %v979 = vmax.f32 %v921, 0.0
      %v980 = vmax.f32 %v926, 0.0
      %v981 = vmax.f32 %v929, 0.0
      %v982 = vmax.f32 %v934, 0.0
      %v983 = vmax.f32 %v937, 0.0
      %v984 = vmax.f32 %v942, 0.0
      %v985 = vmax.f32 %v945, 0.0
      %v986 = vmax.f32 %v950, 0.0
      %v987 = vmax.f32 %v953, 0.0
      %v988 = vpack.c.bf16 %v957, %v956
      %v989 = vpack.c.bf16 %v959, %v958
      %v990 = vpack.c.bf16 %v961, %v960
      %v991 = vpack.c.bf16 %v963, %v962
      %v992 = vpack.c.bf16 %v965, %v964
      %v993 = vpack.c.bf16 %v967, %v966
      %v994 = vpack.c.bf16 %v969, %v968
      %v995 = vpack.c.bf16 %v971, %v970
      %v996 = vpack.c.bf16 %v973, %v972
      %v997 = vpack.c.bf16 %v975, %v974
      %v998 = vpack.c.bf16 %v977, %v976
      %v999 = vpack.c.bf16 %v979, %v978
      %v1000 = vpack.c.bf16 %v981, %v980
      %v1001 = vpack.c.bf16 %v983, %v982
      %v1002 = vpack.c.bf16 %v985, %v984
      %v1003 = vpack.c.bf16 %v987, %v986
      %v1020 = vunpack.c.l.b16 %v988
      %v1021 = vunpack.c.h.b16 %v988
      %v1022 = vunpack.c.l.b16 %v989
      %v1023 = vunpack.c.h.b16 %v989
      %v1024 = vunpack.c.l.b16 %v990
      %v1025 = vunpack.c.h.b16 %v990
      %v1026 = vunpack.c.l.b16 %v991
      %v1027 = vunpack.c.h.b16 %v991
      %v1028 = vunpack.c.l.b16 %v992
      %v1029 = vunpack.c.h.b16 %v992
      %v1030 = vunpack.c.l.b16 %v993
      %v1031 = vunpack.c.h.b16 %v993
      %v1032 = vunpack.c.l.b16 %v994
      %v1033 = vunpack.c.h.b16 %v994
      %v1034 = vunpack.c.l.b16 %v995
      %v1035 = vunpack.c.h.b16 %v995
      %v1036 = vunpack.c.l.b16 %v996
      %v1037 = vunpack.c.h.b16 %v996
      %v1038 = vunpack.c.l.b16 %v997
      %v1039 = vunpack.c.h.b16 %v997
      %v1040 = vunpack.c.l.b16 %v998
      %v1041 = vunpack.c.h.b16 %v998
      %v1042 = vunpack.c.l.b16 %v999
      %v1043 = vunpack.c.h.b16 %v999
      %v1044 = vunpack.c.l.b16 %v1000
      %v1045 = vunpack.c.h.b16 %v1000
      %v1046 = vunpack.c.l.b16 %v1001
      %v1047 = vunpack.c.h.b16 %v1001
      %v1048 = vunpack.c.l.b16 %v1002
      %v1049 = vunpack.c.h.b16 %v1002
      %v1050 = vunpack.c.l.b16 %v1003
      %v1051 = vunpack.c.h.b16 %v1003
      %v1052 = vpack.c.b16 %v1020, %v1020
      %v1053 = vpack.c.b16 %v1021, %v1021
      %v1054 = vpack.c.b16 %v1022, %v1022
      %v1055 = vpack.c.b16 %v1023, %v1023
      %v1056 = vpack.c.b16 %v1024, %v1024
      %v1057 = vpack.c.b16 %v1025, %v1025
      %v1058 = vpack.c.b16 %v1026, %v1026
      %v1059 = vpack.c.b16 %v1027, %v1027
      %v1060 = vpack.c.b16 %v1028, %v1028
      %v1061 = vpack.c.b16 %v1029, %v1029
      %v1062 = vpack.c.b16 %v1030, %v1030
      %v1063 = vpack.c.b16 %v1031, %v1031
      %v1064 = vpack.c.b16 %v1032, %v1032
      %v1065 = vpack.c.b16 %v1033, %v1033
      %v1066 = vpack.c.b16 %v1034, %v1034
      %v1067 = vpack.c.b16 %v1035, %v1035
      %v1068 = vpack.c.b16 %v1036, %v1036
      %v1069 = vpack.c.b16 %v1037, %v1037
      %v1070 = vpack.c.b16 %v1038, %v1038
      %v1071 = vpack.c.b16 %v1039, %v1039
      %v1072 = vpack.c.b16 %v1040, %v1040
      %v1073 = vpack.c.b16 %v1041, %v1041
      %v1074 = vpack.c.b16 %v1042, %v1042
      %v1075 = vpack.c.b16 %v1043, %v1043
      %v1076 = vpack.c.b16 %v1044, %v1044
      %v1077 = vpack.c.b16 %v1045, %v1045
      %v1078 = vpack.c.b16 %v1046, %v1046
      %v1079 = vpack.c.b16 %v1047, %v1047
      %v1080 = vpack.c.b16 %v1048, %v1048
      %v1081 = vpack.c.b16 %v1049, %v1049
      %v1082 = vpack.c.b16 %v1050, %v1050
      %v1083 = vpack.c.b16 %v1051, %v1051
      %1116 = vst [vmem:[#allocation9] sm:$0xf] %v1052
      %1117 = vst [vmem:[#allocation9 + $0x4] sm:$0xf] %v1053
      %1118 = vst [vmem:[#allocation9 + $0x8] sm:$0xf] %v1054
      %1119 = vst [vmem:[#allocation9 + $0xc] sm:$0xf] %v1055
      %1120 = vst [vmem:[#allocation9 + $0x10] sm:$0xf] %v1056
      %1121 = vst [vmem:[#allocation9 + $0x14] sm:$0xf] %v1057
      %1122 = vst [vmem:[#allocation9 + $0x18] sm:$0xf] %v1058
      %1123 = vst [vmem:[#allocation9 + $0x1c] sm:$0xf] %v1059
      %1124 = vst [vmem:[#allocation9 + $0x20] sm:$0xf] %v1060
      %1125 = vst [vmem:[#allocation9 + $0x24] sm:$0xf] %v1061
      %1126 = vst [vmem:[#allocation9 + $0x28] sm:$0xf] %v1062
      %1127 = vst [vmem:[#allocation9 + $0x2c] sm:$0xf] %v1063
      %1128 = vst [vmem:[#allocation9 + $0x30] sm:$0xf] %v1064
      %1129 = vst [vmem:[#allocation9 + $0x34] sm:$0xf] %v1065
      %1130 = vst [vmem:[#allocation9 + $0x38] sm:$0xf] %v1066
      %1131 = vst [vmem:[#allocation9 + $0x3c] sm:$0xf] %v1067
      %1132 = vst [vmem:[#allocation9 + $0x40] sm:$0xf] %v1068
      %1133 = vst [vmem:[#allocation9 + $0x44] sm:$0xf] %v1069
      %1134 = vst [vmem:[#allocation9 + $0x48] sm:$0xf] %v1070
      %1135 = vst [vmem:[#allocation9 + $0x4c] sm:$0xf] %v1071
      %1136 = vst [vmem:[#allocation9 + $0x50] sm:$0xf] %v1072
      %1137 = vst [vmem:[#allocation9 + $0x54] sm:$0xf] %v1073
      %1138 = vst [vmem:[#allocation9 + $0x58] sm:$0xf] %v1074
      %1139 = vst [vmem:[#allocation9 + $0x5c] sm:$0xf] %v1075
      %1140 = vst [vmem:[#allocation9 + $0x60] sm:$0xf] %v1076
      %1141 = vst [vmem:[#allocation9 + $0x64] sm:$0xf] %v1077
      %1142 = vst [vmem:[#allocation9 + $0x68] sm:$0xf] %v1078
      %1143 = vst [vmem:[#allocation9 + $0x6c] sm:$0xf] %v1079
      %1144 = vst [vmem:[#allocation9 + $0x70] sm:$0xf] %v1080
      %1145 = vst [vmem:[#allocation9 + $0x74] sm:$0xf] %v1081
      %1146 = vst [vmem:[#allocation9 + $0x78] sm:$0xf] %v1082
      %1147 = vst [vmem:[#allocation9 + $0x7c] sm:$0xf] %v1083
    $region37: #{tpu_custom_call.1} parent=1 // pred_fallthru
      _
    // Predicated region
    $region38: #{tpu_custom_call.1} parent=1 // pred_check
      _
    $region39: #{tpu_custom_call.1} parent=1 // pred_check_branch
      %1149 = sbr.rel (0) target = $region41
    $region40: #{tpu_custom_call.1} parent=1 // pred_region
      %s1151 = ssub.s32 2048, 2048
      %1152 = vsyncadd [#allocation5], %s1151
      %s1153 = sshll.u32 [#allocation9], 4
      %s1154 = int_to_ptr.vmem [resolvable:$true] %s1153
      %1159 = dma.vmem_to_hbm [thread:$0]  %s1154, 2048, %s4, [#allocation5], 64, 64, 4
    $region41: #{tpu_custom_call.1} parent=1 // pred_fallthru
      _
    // Predicated region
    $region42: #{tpu_custom_call.1} parent=1 // pred_check
      _
    $region43: #{tpu_custom_call.1} parent=1 // pred_check_branch
      %1161 = sbr.rel (0) target = $region45
    $region44: #{tpu_custom_call.1} parent=1 // pred_region
      %1162 = dma.done [#allocation5], 2048
    $region45: #{tpu_custom_call.1} parent=1 // pred_fallthru
      _
    %1163 = vsyncpa [#allocation4], 1
    %1164 = vsyncpa [#allocation7], 1
    %1165 = vsyncpa [#allocation5], 1

</llo_original>
